<compile_context>
chip_gen: v7x
topology: tpu7x:2x2x1
jax: 0.10.0
libtpu: 0.0.40
codegen_flags: <defaults>
</compile_context>

<pallas_src>
import functools
import math

import jax
import jax.numpy as jnp
from jax.experimental import pallas as pl
from jax.experimental.pallas import tpu as pltpu


_FUSED_TILE_BYTES = 2 * 1024 * 1024      # streaming tile for the fused path
_TWO_PASS_TILE_BYTES = 4 * 1024 * 1024   # bigger tiles for the HBM-bound fallback


def _cdiv(a, b):
    return -(-a // b)


def _round_up(x, m):
    return _cdiv(x, m) * m


@functools.lru_cache(maxsize=1)
def _tpu_hw():
    """(physical VMEM bytes per core, TensorCores per chip) -- defensive query."""
    vmem_bytes = 64 * 1024 * 1024        # conservative default (v7x physical VMEM)
    num_cores = 1
    try:
        info = pltpu.get_tpu_info()
        v = getattr(info, "vmem_capacity_bytes", None)
        if v:
            vmem_bytes = int(v)
        for name in ("num_cores", "num_tensorcores", "tensorcores_per_chip"):
            nc = getattr(info, name, None)
            if nc:
                num_cores = int(nc)
                break
    except Exception:
        pass                              # not a TPU / API drift: keep defaults
    return vmem_bytes, num_cores


def _choose_layout(c):
    """Lane width L and channel-groups-per-lane-row g for the lane-dense view."""
    if c <= 128 and 128 % c == 0:
        return 128, 128 // c
    lcm = (c * 128) // math.gcd(c, 128)
    if lcm <= 1024:                       # a few vregs wide, still lane-dense
        return lcm, lcm // c
    # Awkward C: keep C on the lanes (block last dim == full array dim is legal);
    # only the final partial vreg of each row uses masked stores.
    # TODO(synk): could pad channels to a multiple of 128 instead for large C.
    return c, 1


# ----------------------------- Pallas kernels ------------------------------


def _accumulate_sums(st_ref, x, row0, tile_r, n_rows):
    """Accumulate per-lane sum / sum-of-squares of one tile into st_ref rows 0/1.

    The ragged-row mask is hoisted out of the hot path: full tiles take the
    unmasked branch, only the single partial tile masks, and tiles entirely
    past the array (grid overshoot from the 2-core split) contribute nothing.
    """

    @pl.when(row0 + tile_r <= n_rows)          # full tile: unmasked fast path
    def _():
        st_ref[0:1, :] += jnp.sum(x, axis=0, keepdims=True)
        st_ref[1:2, :] += jnp.sum(x * x, axis=0, keepdims=True)

    @pl.when(jnp.logical_and(row0 < n_rows, row0 + tile_r > n_rows))
    def _():                                   # ragged last tile only
        rows = row0 + jax.lax.broadcasted_iota(jnp.int32, (tile_r, 1), 0)
        xm = jnp.where(rows < n_rows, x, 0.0)
        st_ref[0:1, :] += jnp.sum(xm, axis=0, keepdims=True)
        st_ref[1:2, :] += jnp.sum(xm * xm, axis=0, keepdims=True)


def _fused_bn_kernel(x_ref, wb_ref, o_ref, st_ref, slab_ref, *,
                     n_rows, tile_r, c, inv_n, eps):
    """Fused BN.  grid = (phase, tile).

    Phase 0: stream tile from HBM, accumulate sums, stash tile in the VMEM slab.
    Phase boundary (phase 1, tile 0): fold channel groups (XLU rolls) and compute
    scale / shift in-kernel with rsqrt.
    Phase 1: read slab, apply, stream normalized tile out.

    st_ref (8, L) rows: 0 = sum, 1 = sumsq (returned for running stats),
    2 = scale, 3 = shift.  wb_ref (2, L): row 0 = weight (tiled), row 1 = beta.
    """
    ph = pl.program_id(0)
    i = pl.program_id(1)
    lanes = st_ref.shape[1]
    off = pl.multiple_of(i * tile_r, 8)

    @pl.when(ph == 0)
    def _():
        @pl.when(i == 0)
        def _():
            st_ref[...] = jnp.zeros_like(st_ref)

        x = x_ref[...]
        slab_ref[pl.ds(off, tile_r), :] = x
        _accumulate_sums(st_ref, x, i * tile_r, tile_r, n_rows)

    @pl.when(ph == 1)
    def _():
        @pl.when(i == 0)
        def _():
            # Fold the g = L // C channel groups across lanes so every lane
            # holds the full per-channel sums.  g is a power of two, so
            # log2(g) doubling rolls cover the whole group (XLU slot, cheap).
            s = st_ref[...]
            shift = c
            while shift < lanes:
                s = s + pltpu.roll(s, shift=shift, axis=1)
                shift *= 2
            mean = s[0:1, :] * inv_n
            meansqr = s[1:2, :] * inv_n
            var = jnp.maximum(meansqr - mean * mean, 0.0)
            scale = wb_ref[0:1, :] * jax.lax.rsqrt(var + eps)
            st_ref[2:3, :] = scale
            st_ref[3:4, :] = wb_ref[1:2, :] - mean * scale

        xs = slab_ref[pl.ds(off, tile_r), :]
        o_ref[...] = (xs * st_ref[2:3, :] + st_ref[3:4, :]).astype(o_ref.dtype)


def _stats_kernel(x_ref, out_ref, *, n_rows, tile_r, t_per):
    """Fallback pass 1: per-lane sum / sumsq, output-resident accumulator.

    grid = (parts ["parallel" -> both TensorCores on 2-core chips],
            tiles per part ["arbitrary"]).
    """
    p = pl.program_id(0)
    i = pl.program_id(1)

    @pl.when(i == 0)
    def _():
        out_ref[...] = jnp.zeros_like(out_ref)

    _accumulate_sums(out_ref, x_ref[...], (p * t_per + i) * tile_r, tile_r, n_rows)


def _apply_kernel(x_ref, sb_ref, o_ref):
    """Fallback pass 2: out = x * scale + shift, lane-dense unmasked stores."""
    o_ref[...] = (x_ref[...] * sb_ref[0:1, :] + sb_ref[1:2, :]).astype(o_ref.dtype)


# ------------------------------ JAX wrapper ---------------------------------


@functools.partial(jax.jit, static_argnames=("eps", "momentum", "fused_tile_bytes",
                                             "two_pass_tile_bytes", "force_two_pass"))
def _sync_bn_forward(feats, weight, bias, running_mean, running_var, *,
                     eps, momentum,
                     fused_tile_bytes=_FUSED_TILE_BYTES,
                     two_pass_tile_bytes=_TWO_PASS_TILE_BYTES,
                     force_two_pass=False):
    n, c = feats.shape
    L, g = _choose_layout(c)

    # Lane-dense view (R, L).  Free reshape when n % g == 0; otherwise one XLA
    # pad (the extra zero rows contribute nothing to sum / sumsq).
    n_pad = _round_up(n, g)
    x = feats if n_pad == n else jnp.pad(feats, ((0, n_pad - n), (0, 0)))
    r = (n_pad * c) // L
    x2 = x.reshape(r, L)

    vmem_bytes, n_cores = _tpu_hw()
    vmem_limit = min(3 * vmem_bytes // 4, 96 * 1024 * 1024)
    row_bytes = L * 4

    def _tile_rows(target_bytes):
        t = max(8, (target_bytes // row_bytes) // 8 * 8)
        return min(t, _round_up(r, 8))

    # -------- fused path: feats resident in a VMEM slab (1 read + 1 write) ----
    ft_r = _tile_rows(fused_tile_bytes)
    f_t = _cdiv(r, ft_r)
    slab_bytes = f_t * ft_r * row_bytes
    fused_fits = slab_bytes + 4 * ft_r * row_bytes + (2 << 20) <= vmem_limit
    use_fused = fused_fits and not force_two_pass

    if use_fused:
        wb = jnp.stack([jnp.tile(weight, g), jnp.tile(bias, g)])        # (2, L)
        out2, psums = pl.pallas_call(
            functools.partial(_fused_bn_kernel, n_rows=r, tile_r=ft_r, c=c,
                              inv_n=1.0 / n, eps=eps),
            out_shape=(jax.ShapeDtypeStruct((r, L), jnp.float32),
                       jax.ShapeDtypeStruct((8, L), jnp.float32)),
            grid_spec=pltpu.PrefetchScalarGridSpec(
                num_scalar_prefetch=0,
                grid=(2, f_t),
                in_specs=[
                    # phase 0: stream tile i; phase 1: park on the last block
                    # (same as the previous step -> no redundant HBM re-read).
                    pl.BlockSpec((ft_r, L),
                                 lambda ph, i: ((1 - ph) * i + ph * (f_t - 1), 0)),
                    pl.BlockSpec((2, L), lambda ph, i: (0, 0)),
                ],
                out_specs=(
                    # Written only during phase 1; block 0 stays resident through
                    # phase 0 and is first flushed after phase 1 fills it.
                    pl.BlockSpec((ft_r, L), lambda ph, i: (ph * i, 0)),
                    pl.BlockSpec((8, L), lambda ph, i: (0, 0)),
                ),
                scratch_shapes=[pltpu.VMEM((f_t * ft_r, L), jnp.float32)],
            ),
            compiler_params=pltpu.CompilerParams(
                dimension_semantics=("arbitrary", "arbitrary"),
                vmem_limit_bytes=vmem_limit),
        )(x2, wb)
        folded = psums[:2].reshape(2, g, c).sum(axis=1)                 # (2, C)
    else:
        # -------- two-pass fallback: feats too large for the VMEM slab --------
        tile_r = _tile_rows(two_pass_tile_bytes)
        t_total = _cdiv(r, tile_r)
        n_parts = 2 if (n_cores >= 2 and t_total >= 4) else 1
        t_per = _cdiv(t_total, n_parts)

        psums = pl.pallas_call(
            functools.partial(_stats_kernel, n_rows=r, tile_r=tile_r, t_per=t_per),
            out_shape=jax.ShapeDtypeStruct((n_parts * 8, L), jnp.float32),
            grid_spec=pltpu.PrefetchScalarGridSpec(
                num_scalar_prefetch=0,
                grid=(n_parts, t_per),
                in_specs=[pl.BlockSpec(
                    (tile_r, L),
                    # Overshoot tiles of the rounded 2-way split are clamped to
                    # the last real block (re-fetch skipped) and skipped in-kernel.
                    lambda p, i: (jnp.minimum(p * t_per + i, t_total - 1), 0))],
                out_specs=pl.BlockSpec((8, L), lambda p, i: (p, 0)),
            ),
            compiler_params=pltpu.CompilerParams(
                dimension_semantics=("parallel", "arbitrary"),
                vmem_limit_bytes=vmem_limit),
        )(x2)
        folded = psums.reshape(n_parts, 8, g, c)[:, :2].sum(axis=(0, 2))  # (2, C)

    mean = folded[0] / n
    meansqr = folded[1] / n
    var = jnp.maximum(meansqr - mean * mean, 0.0)   # clamp f32 cancellation error

    if not use_fused:
        invstd = jax.lax.rsqrt(var + eps)
        scale = weight * invstd
        shift = bias - mean * scale
        sb = jnp.stack([jnp.tile(scale, g), jnp.tile(shift, g)])        # (2, L)
        out2 = pl.pallas_call(
            _apply_kernel,
            out_shape=jax.ShapeDtypeStruct((r, L), jnp.float32),
            grid_spec=pltpu.PrefetchScalarGridSpec(
                num_scalar_prefetch=0,
                grid=(t_total,),
                in_specs=[pl.BlockSpec((tile_r, L), lambda i: (i, 0)),
                          pl.BlockSpec((2, L), lambda i: (0, 0))],
                out_specs=pl.BlockSpec((tile_r, L), lambda i: (i, 0)),
            ),
            compiler_params=pltpu.CompilerParams(
                dimension_semantics=("parallel",),
                vmem_limit_bytes=vmem_limit),
        )(x2, sb)

    out = out2.reshape(n_pad, c)
    if n_pad != n:
        out = out[:n]

    # Running-stat update with biased var (the module's custom "naive sync"
    # path; plain nn.BatchNorm1d would use the unbiased estimate here).
    new_rm = running_mean + momentum * (mean - running_mean)
    new_rv = running_var + momentum * (var - running_var)
    return out, new_rm, new_rv


# ------------------------------ module glue ---------------------------------


class SparseTensor:
    """Minimal JAX-side mirror of the PyTorch SparseTensor container (glue)."""

    def __init__(self, feats, coords, cur_tensor_stride=1):
        self.F = feats
        self.C = coords
        self.s = cur_tensor_stride
        self.coord_maps = {}
        self.kernel_maps = {}


class SparseSyncBatchNorm1d:
    """JAX/Pallas port of SparseSyncBatchNorm1d (training forward, world_size == 1)."""

    def __init__(self, num_features, *, eps=1e-5, momentum=0.1):
        self.num_features = num_features
        self.eps = float(eps)
        self.momentum = float(momentum)
        # nn.BatchNorm1d default init (deterministic, no checkpoint load).
        self.weight = jnp.ones((num_features,), jnp.float32)
        self.bias = jnp.zeros((num_features,), jnp.float32)
        self.running_mean = jnp.zeros((num_features,), jnp.float32)
        self.running_var = jnp.ones((num_features,), jnp.float32)

    def __call__(self, inputs: SparseTensor) -> SparseTensor:
        feats = inputs.F
        assert feats.dtype == jnp.float32, "input should be float32"
        assert feats.shape[0] > 0, "SyncBN does not support empty inputs"
        n, c = feats.shape
        assert c == self.num_features

        out_feats, self.running_mean, self.running_var = _sync_bn_forward(
            feats, self.weight, self.bias, self.running_mean, self.running_var,
            eps=self.eps, momentum=self.momentum)
        # TODO(synk): eval-mode path (normalize with running stats) not wired up;
        # only the training/sync forward (the custom hot path) is implemented.

        outputs = SparseTensor(coords=inputs.C, feats=out_feats,
                               cur_tensor_stride=inputs.s)
        outputs.coord_maps = inputs.coord_maps
        outputs.kernel_maps = inputs.kernel_maps
        return outputs


# ---------------------------------- main -------------------------------------


def _reference(feats, weight, bias, eps):
    mean = jnp.mean(feats, axis=0)
    meansqr = jnp.mean(feats * feats, axis=0)
    var = meansqr - mean * mean
    invstd = jax.lax.rsqrt(var + eps)
    scale = weight * invstd
    shift = bias - mean * scale
    return feats * scale[None, :] + shift[None, :]


def _check_direct(feats, weight, bias, *, eps=1e-5, momentum=0.1, **kwargs):
    c = feats.shape[1]
    rm = jnp.zeros((c,), jnp.float32)
    rv = jnp.ones((c,), jnp.float32)
    out, new_rm, new_rv = _sync_bn_forward(feats, weight, bias, rm, rv,
                                           eps=eps, momentum=momentum, **kwargs)
    out = jax.block_until_ready(out)
    ref = _reference(feats, weight, bias, eps)
    assert out.shape == feats.shape and out.dtype == jnp.float32
    assert jnp.allclose(out, ref, atol=1e-4, rtol=1e-4), "feats mismatch"
    mean_ref = jnp.mean(feats, axis=0)
    var_ref = jnp.mean(feats * feats, axis=0) - mean_ref * mean_ref
    assert jnp.allclose(new_rm, momentum * mean_ref, atol=1e-4, rtol=1e-4)
    assert jnp.allclose(new_rv, 1.0 + momentum * (var_ref - 1.0),
                        atol=1e-4, rtol=1e-4)


if __name__ == "__main__":
    key = jax.random.PRNGKey(0)
    k1, k2, k3, k4, kw16, kb16, kw24, kb24 = jax.random.split(key, 8)

    w16 = jax.random.uniform(kw16, (16,), jnp.float32, 0.5, 1.5)
    b16 = jax.random.uniform(kb16, (16,), jnp.float32, -0.5, 0.5)

    # Case 1: module-level path (fused kernel), N aligned to the lane groups.
    feats1 = jax.random.normal(k1, (64, 16), jnp.float32) * 2.0 + 0.5
    coords1 = jax.random.randint(k2, (64, 4), 0, 32, jnp.int32)
    bn = SparseSyncBatchNorm1d(16, eps=1e-5, momentum=0.1)
    bn.weight, bn.bias = w16, b16
    xin = SparseTensor(feats=feats1, coords=coords1, cur_tensor_stride=1)
    xin.coord_maps = {1: coords1}
    out_sp = bn(xin)
    out_feats = jax.block_until_ready(out_sp.F)
    ref1 = _reference(feats1, w16, b16, 1e-5)
    assert out_feats.shape == (64, 16) and out_feats.dtype == jnp.float32
    assert jnp.allclose(out_feats, ref1, atol=1e-4, rtol=1e-4)
    mean1 = jnp.mean(feats1, axis=0)
    var1 = jnp.mean(feats1 * feats1, axis=0) - mean1 * mean1
    assert jnp.allclose(bn.running_mean, 0.1 * mean1, atol=1e-4, rtol=1e-4)
    assert jnp.allclose(bn.running_var, 1.0 + 0.1 * (var1 - 1.0), atol=1e-4, rtol=1e-4)
    assert out_sp.s == xin.s and out_sp.coord_maps is xin.coord_maps

    # Case 2: ragged N (pad-to-group + masked last tile), fused path.
    feats2 = jax.random.normal(k3, (300, 16), jnp.float32) * 1.5 - 0.25
    _check_direct(feats2, w16, b16)

    # Case 3: fused path with tiny tiles -> multi-tile slab + ragged last tile.
    feats3 = jax.random.normal(k4, (1000, 16), jnp.float32) * 1.5 - 0.25
    _check_direct(feats3, w16, b16, fused_tile_bytes=16 * 1024)

    # Case 4: two-pass fallback (forced) with tiny tiles -> multi-tile
    # accumulation, exact-grid handling and the hoisted ragged mask.
    _check_direct(feats3, w16, b16, force_two_pass=True,
                  two_pass_tile_bytes=16 * 1024)

    # Case 5: C = 24 does not divide 128 -> lcm layout (L = 384, g = 16),
    # exercising the in-kernel channel-group fold (pltpu.roll).
    w24 = jax.random.uniform(kw24, (24,), jnp.float32, 0.5, 1.5)
    b24 = jax.random.uniform(kb24, (24,), jnp.float32, -0.5, 0.5)
    feats5 = jax.random.normal(k1, (200, 24), jnp.float32) * 0.7 + 1.0
    _check_direct(feats5, w24, b24)

    print("KERNEL_OK")
</pallas_src>

<mosaic_0001>
module attributes {stable_mosaic.version = 11 : i64} {
  func.func @_fused_bn_kernel(%arg0: i32, %arg1: i32, %arg2: memref<8x128xf32, #tpu.memory_space<vmem>>, %arg3: memref<2x128xf32, #tpu.memory_space<vmem>>, %arg4: memref<8x128xf32, #tpu.memory_space<vmem>>, %arg5: memref<8x128xf32, #tpu.memory_space<vmem>>, %arg6: memref<8x128xf32, #tpu.memory_space<vmem>>) attributes {dimension_semantics = [#tpu.dimension_semantics<arbitrary>, #tpu.dimension_semantics<arbitrary>], iteration_bounds = array<i64: 2, 1>, scalar_prefetch = 0 : i64, scratch_operands = 1 : i64, tpu.core_type = #tpu.core_type<tc>, window_params = [{transform_indices = @transform_0, window_bounds = array<i64: 8, 128>}, {pipeline_mode = #tpu.pipeline_mode<synchronous>, transform_indices = @transform_1, window_bounds = array<i64: 2, 128>}, {transform_indices = @transform_2, window_bounds = array<i64: 8, 128>}, {pipeline_mode = #tpu.pipeline_mode<synchronous>, transform_indices = @transform_3, window_bounds = array<i64: 8, 128>}]} {
    %c8_i32 = arith.constant 8 : i32
    %0 = arith.muli %arg1, %c8_i32 : i32
    %1 = tpu.assume_multiple %0, 8 : i32
    %c0_i32 = arith.constant 0 : i32
    %2 = arith.cmpi eq, %arg0, %c0_i32 : i32
    %3 = arith.extui %2 : i1 to i32
    %c0_i32_0 = arith.constant 0 : i32
    %4 = arith.cmpi ne, %3, %c0_i32_0 : i32
    scf.if %4 {
      %c0_i32_2 = arith.constant 0 : i32
      %8 = arith.cmpi eq, %arg1, %c0_i32_2 : i32
      %9 = arith.extui %8 : i1 to i32
      %c0_i32_3 = arith.constant 0 : i32
      %10 = arith.cmpi ne, %9, %c0_i32_3 : i32
      scf.if %10 {
        %cst = arith.constant 0.000000e+00 : f32
        %25 = vector.broadcast %cst : f32 to vector<8x128xf32>
        %c0_14 = arith.constant 0 : index
        %c0_15 = arith.constant 0 : index
        %26 = vector.load %arg5[%c0_14, %c0_15] : memref<8x128xf32, #tpu.memory_space<vmem>>, vector<8x128xf32>
        tpu.vector_store %arg5[%c0_14, %c0_15], %25 {strides = array<i32>} : memref<8x128xf32, #tpu.memory_space<vmem>>, vector<8x128xf32>,
      } else {
      }
      %c0 = arith.constant 0 : index
      %c0_4 = arith.constant 0 : index
      %11 = vector.load %arg2[%c0, %c0_4] : memref<8x128xf32, #tpu.memory_space<vmem>>, vector<8x128xf32>
      %12 = arith.index_cast %1 : i32 to index
      %c0_5 = arith.constant 0 : index
      %13 = vector.load %arg6[%12, %c0_5] : memref<8x128xf32, #tpu.memory_space<vmem>>, vector<8x128xf32>
      tpu.vector_store %arg6[%12, %c0_5], %11 {strides = array<i32>} : memref<8x128xf32, #tpu.memory_space<vmem>>, vector<8x128xf32>,
      %c8_i32_6 = arith.constant 8 : i32
      %14 = arith.muli %arg1, %c8_i32_6 : i32
      %c8_i32_7 = arith.constant 8 : i32
      %15 = arith.addi %14, %c8_i32_7 : i32
      %c8_i32_8 = arith.constant 8 : i32
      %16 = arith.cmpi sle, %15, %c8_i32_8 : i32
      %17 = arith.extui %16 : i1 to i32
      %c0_i32_9 = arith.constant 0 : i32
      %18 = arith.cmpi ne, %17, %c0_i32_9 : i32
      scf.if %18 {
        %c0_14 = arith.constant 0 : index
        %c0_15 = arith.constant 0 : index
        %25 = vector.load %arg5[%c0_14, %c0_15] : memref<8x128xf32, #tpu.memory_space<vmem>>, vector<1x128xf32>
        %cst = arith.constant dense<0.000000e+00> : vector<128xf32>
        %26 = vector.multi_reduction <add>, %11, %cst [0] : vector<8x128xf32> to vector<128xf32>
        %27 = vector.shape_cast %26 : vector<128xf32> to vector<1x128xf32>
        %28 = arith.addf %25, %27 : vector<1x128xf32>
        %c0_16 = arith.constant 0 : index
        %c0_17 = arith.constant 0 : index
        %29 = vector.load %arg5[%c0_16, %c0_17] : memref<8x128xf32, #tpu.memory_space<vmem>>, vector<1x128xf32>
        tpu.vector_store %arg5[%c0_16, %c0_17], %28 {strides = array<i32>} : memref<8x128xf32, #tpu.memory_space<vmem>>, vector<1x128xf32>,
        %c1 = arith.constant 1 : index
        %c0_18 = arith.constant 0 : index
        %30 = vector.load %arg5[%c1, %c0_18] : memref<8x128xf32, #tpu.memory_space<vmem>>, vector<1x128xf32>
        %31 = arith.mulf %11, %11 : vector<8x128xf32>
        %cst_19 = arith.constant dense<0.000000e+00> : vector<128xf32>
        %32 = vector.multi_reduction <add>, %31, %cst_19 [0] : vector<8x128xf32> to vector<128xf32>
        %33 = vector.shape_cast %32 : vector<128xf32> to vector<1x128xf32>
        %34 = arith.addf %30, %33 : vector<1x128xf32>
        %c1_20 = arith.constant 1 : index
        %c0_21 = arith.constant 0 : index
        %35 = vector.load %arg5[%c1_20, %c0_21] : memref<8x128xf32, #tpu.memory_space<vmem>>, vector<1x128xf32>
        tpu.vector_store %arg5[%c1_20, %c0_21], %34 {strides = array<i32>} : memref<8x128xf32, #tpu.memory_space<vmem>>, vector<1x128xf32>,
      } else {
      }
      %c8_i32_10 = arith.constant 8 : i32
      %19 = arith.cmpi slt, %14, %c8_i32_10 : i32
      %c8_i32_11 = arith.constant 8 : i32
      %20 = arith.addi %14, %c8_i32_11 : i32
      %c8_i32_12 = arith.constant 8 : i32
      %21 = arith.cmpi sgt, %20, %c8_i32_12 : i32
      %22 = arith.andi %19, %21 : i1
      %23 = arith.extui %22 : i1 to i32
      %c0_i32_13 = arith.constant 0 : i32
      %24 = arith.cmpi ne, %23, %c0_i32_13 : i32
      scf.if %24 {
        %25 = tpu.iota {dimensions = array<i32: 0>} : vector<8x1xi32>
        %26 = vector.broadcast %14 : i32 to vector<8x1xi32>
        %27 = arith.addi %26, %25 : vector<8x1xi32>
        %c8_i32_14 = arith.constant 8 : i32
        %28 = vector.broadcast %c8_i32_14 : i32 to vector<8x1xi32>
        %29 = arith.cmpi slt, %27, %28 : vector<8x1xi32>
        %cst = arith.constant 0.000000e+00 : f32
        %30 = vector.shape_cast %29 : vector<8x1xi1> to vector<8x1xi1>
        %31 = vector.broadcast %30 : vector<8x1xi1> to vector<8x128xi1>
        %32 = vector.broadcast %cst : f32 to vector<8x128xf32>
        %33 = arith.select %31, %11, %32 : vector<8x128xi1>, vector<8x128xf32>
        %c0_15 = arith.constant 0 : index
        %c0_16 = arith.constant 0 : index
        %34 = vector.load %arg5[%c0_15, %c0_16] : memref<8x128xf32, #tpu.memory_space<vmem>>, vector<1x128xf32>
        %cst_17 = arith.constant dense<0.000000e+00> : vector<128xf32>
        %35 = vector.multi_reduction <add>, %33, %cst_17 [0] : vector<8x128xf32> to vector<128xf32>
        %36 = vector.shape_cast %35 : vector<128xf32> to vector<1x128xf32>
        %37 = arith.addf %34, %36 : vector<1x128xf32>
        %c0_18 = arith.constant 0 : index
        %c0_19 = arith.constant 0 : index
        %38 = vector.load %arg5[%c0_18, %c0_19] : memref<8x128xf32, #tpu.memory_space<vmem>>, vector<1x128xf32>
        tpu.vector_store %arg5[%c0_18, %c0_19], %37 {strides = array<i32>} : memref<8x128xf32, #tpu.memory_space<vmem>>, vector<1x128xf32>,
        %c1 = arith.constant 1 : index
        %c0_20 = arith.constant 0 : index
        %39 = vector.load %arg5[%c1, %c0_20] : memref<8x128xf32, #tpu.memory_space<vmem>>, vector<1x128xf32>
        %40 = arith.mulf %33, %33 : vector<8x128xf32>
        %cst_21 = arith.constant dense<0.000000e+00> : vector<128xf32>
        %41 = vector.multi_reduction <add>, %40, %cst_21 [0] : vector<8x128xf32> to vector<128xf32>
        %42 = vector.shape_cast %41 : vector<128xf32> to vector<1x128xf32>
        %43 = arith.addf %39, %42 : vector<1x128xf32>
        %c1_22 = arith.constant 1 : index
        %c0_23 = arith.constant 0 : index
        %44 = vector.load %arg5[%c1_22, %c0_23] : memref<8x128xf32, #tpu.memory_space<vmem>>, vector<1x128xf32>
        tpu.vector_store %arg5[%c1_22, %c0_23], %43 {strides = array<i32>} : memref<8x128xf32, #tpu.memory_space<vmem>>, vector<1x128xf32>,
      } else {
      }
    } else {
    }
    %c1_i32 = arith.constant 1 : i32
    %5 = arith.cmpi eq, %arg0, %c1_i32 : i32
    %6 = arith.extui %5 : i1 to i32
    %c0_i32_1 = arith.constant 0 : i32
    %7 = arith.cmpi ne, %6, %c0_i32_1 : i32
    scf.if %7 {
      %c0_i32_2 = arith.constant 0 : i32
      %8 = arith.cmpi eq, %arg1, %c0_i32_2 : i32
      %9 = arith.extui %8 : i1 to i32
      %c0_i32_3 = arith.constant 0 : i32
      %10 = arith.cmpi ne, %9, %c0_i32_3 : i32
      scf.if %10 {
        %c0_8 = arith.constant 0 : index
        %c0_9 = arith.constant 0 : index
        %20 = vector.load %arg5[%c0_8, %c0_9] : memref<8x128xf32, #tpu.memory_space<vmem>>, vector<8x128xf32>
        %c16_i32 = arith.constant 16 : i32
        %21 = tpu.dynamic_rotate %20 by %c16_i32 dim 1 : vector<8x128xf32>, i32 -> vector<8x128xf32>
        %22 = arith.addf %20, %21 : vector<8x128xf32>
        %c32_i32 = arith.constant 32 : i32
        %23 = tpu.dynamic_rotate %22 by %c32_i32 dim 1 : vector<8x128xf32>, i32 -> vector<8x128xf32>
        %24 = arith.addf %22, %23 : vector<8x128xf32>
        %c64_i32 = arith.constant 64 : i32
        %25 = tpu.dynamic_rotate %24 by %c64_i32 dim 1 : vector<8x128xf32>, i32 -> vector<8x128xf32>
        %26 = arith.addf %24, %25 : vector<8x128xf32>
        %27 = vector.extract_strided_slice %26 {offsets = [0, 0], sizes = [1, 128], strides = [1, 1]} : vector<8x128xf32> to vector<1x128xf32>
        %cst = arith.constant 1.562500e-02 : f32
        %28 = vector.broadcast %cst : f32 to vector<1x128xf32>
        %29 = arith.mulf %27, %28 : vector<1x128xf32>
        %30 = vector.extract_strided_slice %26 {offsets = [1, 0], sizes = [1, 128], strides = [1, 1]} : vector<8x128xf32> to vector<1x128xf32>
        %cst_10 = arith.constant 1.562500e-02 : f32
        %31 = vector.broadcast %cst_10 : f32 to vector<1x128xf32>
        %32 = arith.mulf %30, %31 : vector<1x128xf32>
        %33 = arith.mulf %29, %29 : vector<1x128xf32>
        %34 = arith.subf %32, %33 : vector<1x128xf32>
        %cst_11 = arith.constant 0.000000e+00 : f32
        %35 = vector.broadcast %cst_11 : f32 to vector<1x128xf32>
        %36 = arith.maximumf %34, %35 : vector<1x128xf32>
        %c0_12 = arith.constant 0 : index
        %c0_13 = arith.constant 0 : index
        %37 = vector.load %arg3[%c0_12, %c0_13] : memref<2x128xf32, #tpu.memory_space<vmem>>, vector<1x128xf32>
        %cst_14 = arith.constant 9.99999974E-6 : f32
        %38 = vector.broadcast %cst_14 : f32 to vector<1x128xf32>
        %39 = arith.addf %36, %38 : vector<1x128xf32>
        %40 = math.rsqrt %39 : vector<1x128xf32>
        %41 = arith.mulf %37, %40 : vector<1x128xf32>
        %c2_15 = arith.constant 2 : index
        %c0_16 = arith.constant 0 : index
        %42 = vector.load %arg5[%c2_15, %c0_16] : memref<8x128xf32, #tpu.memory_space<vmem>>, vector<1x128xf32>
        tpu.vector_store %arg5[%c2_15, %c0_16], %41 {strides = array<i32>} : memref<8x128xf32, #tpu.memory_space<vmem>>, vector<1x128xf32>,
        %c1 = arith.constant 1 : index
        %c0_17 = arith.constant 0 : index
        %43 = vector.load %arg3[%c1, %c0_17] : memref<2x128xf32, #tpu.memory_space<vmem>>, vector<1x128xf32>
        %44 = arith.mulf %29, %41 : vector<1x128xf32>
        %45 = arith.subf %43, %44 : vector<1x128xf32>
        %c3_18 = arith.constant 3 : index
        %c0_19 = arith.constant 0 : index
        %46 = vector.load %arg5[%c3_18, %c0_19] : memref<8x128xf32, #tpu.memory_space<vmem>>, vector<1x128xf32>
        tpu.vector_store %arg5[%c3_18, %c0_19], %45 {strides = array<i32>} : memref<8x128xf32, #tpu.memory_space<vmem>>, vector<1x128xf32>,
      } else {
      }
      %11 = arith.index_cast %1 : i32 to index
      %c0 = arith.constant 0 : index
      %12 = vector.load %arg6[%11, %c0] : memref<8x128xf32, #tpu.memory_space<vmem>>, vector<8x128xf32>
      %c2 = arith.constant 2 : index
      %c0_4 = arith.constant 0 : index
      %13 = vector.load %arg5[%c2, %c0_4] : memref<8x128xf32, #tpu.memory_space<vmem>>, vector<1x128xf32>
      %14 = vector.broadcast %13 : vector<1x128xf32> to vector<8x128xf32>
      %15 = arith.mulf %12, %14 : vector<8x128xf32>
      %c3 = arith.constant 3 : index
      %c0_5 = arith.constant 0 : index
      %16 = vector.load %arg5[%c3, %c0_5] : memref<8x128xf32, #tpu.memory_space<vmem>>, vector<1x128xf32>
      %17 = vector.broadcast %16 : vector<1x128xf32> to vector<8x128xf32>
      %18 = arith.addf %15, %17 : vector<8x128xf32>
      %c0_6 = arith.constant 0 : index
      %c0_7 = arith.constant 0 : index
      %19 = vector.load %arg4[%c0_6, %c0_7] : memref<8x128xf32, #tpu.memory_space<vmem>>, vector<8x128xf32>
      tpu.vector_store %arg4[%c0_6, %c0_7], %18 {strides = array<i32>} : memref<8x128xf32, #tpu.memory_space<vmem>>, vector<8x128xf32>,
    } else {
    }
    return
  }
  func.func @transform_0(%arg0: i32, %arg1: i32) -> (i32, i32) {
    %c1_i32 = arith.constant 1 : i32
    %0 = arith.subi %c1_i32, %arg0 : i32
    %1 = arith.muli %0, %arg1 : i32
    %c0_i32 = arith.constant 0 : i32
    %2 = arith.muli %arg0, %c0_i32 : i32
    %3 = arith.addi %1, %2 : i32
    %c0_i32_0 = arith.constant 0 : i32
    %c0_i32_1 = arith.constant 0 : i32
    return %3, %c0_i32_0 : i32, i32
  }
  func.func @transform_1(%arg0: i32, %arg1: i32) -> (i32, i32) {
    %c0_i32 = arith.constant 0 : i32
    %c0_i32_0 = arith.constant 0 : i32
    %c0_i32_1 = arith.constant 0 : i32
    return %c0_i32, %c0_i32_0 : i32, i32
  }
  func.func @transform_2(%arg0: i32, %arg1: i32) -> (i32, i32) {
    %0 = arith.muli %arg0, %arg1 : i32
    %c0_i32 = arith.constant 0 : i32
    %c0_i32_0 = arith.constant 0 : i32
    return %0, %c0_i32 : i32, i32
  }
  func.func @transform_3(%arg0: i32, %arg1: i32) -> (i32, i32) {
    %c0_i32 = arith.constant 0 : i32
    %c0_i32_0 = arith.constant 0 : i32
    %c0_i32_1 = arith.constant 0 : i32
    return %c0_i32, %c0_i32_0 : i32, i32
  }
}

</mosaic_0001>

<llo_original>
// kernel: tile.18
$region0: #{tile.18}
  %s0 = inlined_call_operand.vmem [shape: f32[8,16], index: 0, kind: input, shape index: {}]
  %s1 = inlined_call_operand.vmem [shape: f32[1,128], index: 1, kind: output, shape index: {}]
  $region1: #{tile.18} parent=0
    #allocation0 [shape = 'u8[4096]{0}', space=vmem, size = 0x1000, scoped, tag = 'scoped mem for output reshape']
    %v2 = vld [vmem:[%s0] sm:$0x1]
    %vm3 = vcmask 130048
    %4 = vst.msk [vmem:[#allocation0] sm:$0x1] %vm3, %v2
    %s5 = scalar_lea.vmem %s0, 7
    %v6 = vld [vmem:[%s5] sm:$0x1]
    %7 = vrot.lane.b32.xlu0 %v6, 112
    %v8 = vpop.permute.xlu0 %7
    %vm9 = vcmask 1048448
    %10 = vst.msk [vmem:[#allocation0] sm:$0x1] %vm9, %v8
    %s11 = scalar_lea.vmem %s0, 6
    %v12 = vld [vmem:[%s11] sm:$0x1]
    %13 = vrot.lane.b32.xlu0 %v12, 96
    %v14 = vpop.permute.xlu0 %13
    %vm15 = vcmask 917248
    %16 = vst.msk [vmem:[#allocation0] sm:$0x1] %vm15, %v14
    %s17 = scalar_lea.vmem %s0, 5
    %v18 = vld [vmem:[%s17] sm:$0x1]
    %19 = vrot.lane.b32.xlu0 %v18, 80
    %v20 = vpop.permute.xlu0 %19
    %vm21 = vcmask 786048
    %22 = vst.msk [vmem:[#allocation0] sm:$0x1] %vm21, %v20
    %s23 = scalar_lea.vmem %s0, 4
    %v24 = vld [vmem:[%s23] sm:$0x1]
    %25 = vrot.lane.b32.xlu0 %v24, 64
    %v26 = vpop.permute.xlu0 %25
    %vm27 = vcmask 654848
    %28 = vst.msk [vmem:[#allocation0] sm:$0x1] %vm27, %v26
    %s29 = scalar_lea.vmem %s0, 3
    %v30 = vld [vmem:[%s29] sm:$0x1]
    %31 = vrot.lane.b32.xlu0 %v30, 48
    %v32 = vpop.permute.xlu0 %31
    %vm33 = vcmask 523648
    %34 = vst.msk [vmem:[#allocation0] sm:$0x1] %vm33, %v32
    %s35 = scalar_lea.vmem %s0, 2
    %v36 = vld [vmem:[%s35] sm:$0x1]
    %37 = vrot.lane.b32.xlu0 %v36, 32
    %v38 = vpop.permute.xlu0 %37
    %vm39 = vcmask 392448
    %40 = vst.msk [vmem:[#allocation0] sm:$0x1] %vm39, %v38
    %s41 = scalar_lea.vmem %s0, 1
    %v42 = vld [vmem:[%s41] sm:$0x1]
    %43 = vrot.lane.b32.xlu0 %v42, 16
    %v44 = vpop.permute.xlu0 %43
    %vm45 = vcmask 261248
    %46 = vst.msk [vmem:[#allocation0] sm:$0x1] %vm45, %v44
    %s48 = sshllo.u32 0, 1
    %v50 = vld [vmem:[#allocation0] sm:%s48]
    %s51 = sshllo.u32 0, 1
    %52 = vst [vmem:[%s1] sm:%s51] %v50

// kernel: tile.13
$region0: #{tile.13}
  #allocation0 [shape = 's32[1]{0}', space=sflag, size = 0x4, scoped, tag = 'scoped memory for tile.13']
  %s0 = inlined_call_operand.vmem [shape: f32[16], index: 0, kind: input, shape index: {}]
  %s1 = inlined_call_operand.vmem [shape: f32[8,16], index: 1, kind: output, shape index: {}]
  // Predicated region
  $region2: #{tile.13} parent=0 // pred_check
    _
  $region3: #{tile.13} parent=0 // pred_check_branch
    %3 = sbr.rel (0) target = $region5
  $region4: #{tile.13} parent=0 // pred_region
    _
  $region5: #{tile.13} parent=0 // pred_fallthru
    _
  %v4 = vld [vmem:[%s0] ss:$0 sm:$0xff]
  %5 = vst [vmem:[%s1] sm:$0xff] %v4

// kernel: _sync_bn_forward.1
$region0: #{_sync_bn_forward.1}
  #allocation0 [shape = 'u32[]', space=smem, size = 0x4, offset = 0x4, fixed_abs, tag = 'smem constant byte address 0x4 - core index']
  #allocation1 [shape = 'u32[144,128]{1,0:T(1,128)}', space=vmem, size = 0x12000, scoped, tag = 'internal scratch']
  #allocation2 [shape = 'f32[8,128]{1,0:T(8,128)}', space=vmem, size = 0x1000, scoped, tag = 'scratch operand']
  %s0 = inlined_call_operand.vmem [shape: f32[8,128], index: 0, kind: input, shape index: {}]
  %s1 = inlined_call_operand.vmem [shape: f32[2,128], index: 1, kind: input, shape index: {}]
  %s2 = inlined_call_operand.vmem [shape: f32[8,128], index: 2, kind: output, shape index: {0}]
  %s3 = inlined_call_operand.vmem [shape: f32[8,128], index: 3, kind: output, shape index: {1}]
  %4 = xla_tuple %s2, %s3
  %s5 = sld [smem:[#allocation0]]
  $region73: #{_sync_bn_forward.1} parent=0
    _
  %s7 = ssub.s32 1, %s5
  %s8 = scalar_select 0, %s7, %s5
  loop: start=0, step=1, limit=4
  $region2: #{_sync_bn_forward.1} parent=0 // loop_pre_header
    _
  $region3: #{_sync_bn_forward.1} parent=0 // loop_header
    %s10 = sphi 0, %s14
    %p11 = scmp.ge.s32.totalorder %s10, 4
    %s17 = sphi 0, %s29
    %s18 = sphi 0, %s25
    %s19 = sphi 0, %s17
    %s20 = sphi 0, %s18
    %s21 = sphi 0, %s19
    %s22 = sphi 0, %s20
    %s36 = sphi 0, %s38
    %s39 = sphi 0, %s36
    %s40 = sphi 0, %s39
    %s56 = sphi 0, %s40
    %s60 = sphi 0, %s60
    %s62 = sphi 0, %s60
    %s63 = sphi 0, %s62
    %s77 = sphi 0, %s63
    %s85 = sphi 0, %s87
    %s88 = sphi 0, %s85
    %s89 = sphi 0, %s88
    %s105 = sphi 0, %s89
    %s109 = sphi 0, %s109
    %s111 = sphi 0, %s109
    %s112 = sphi 0, %s111
    %s126 = sphi 0, %s112
  $region4: #{_sync_bn_forward.1} parent=0 // loop_header_branch
    %13 = sbr.rel (%p11) target = $region8
  $region5: #{_sync_bn_forward.1} parent=0 // loop_body
    %s15 = ssub.s32 %s10, 1
    %s16 = ssub.s32 %s10, 2
    %s23 = sadd.s32 1, %s18
    %p24 = scmp.ge.s32.totalorder %s23, 1
    %s25 = scalar_select %p24, 0, %s23
    %s26 = sadd.s32 1, %s17
    %s27 = scalar_select %p24, %s26, %s17
    %p28 = scmp.ge.s32.totalorder %s27, 2
    %s29 = scalar_select %p28, 0, %s27
    %s30 = ssub.s32 1, %s17
    %s31 = smul.u32 %s30, %s18
    %s32 = ssub.s32 1, %s29
    %s33 = smul.u32 %s32, %s25
    %s34 = ssub.s32 %s31, %s33
    %p35 = scmp.eq.s32.totalorder %s34, 0
    %s37 = sadd.s32 %s36, 1
    %s38 = scalar_select %p35, %s36, %s37
    %p41 = pneg %p35
    %p42 = scmp.eq.s32.totalorder %s10, 1
    %p43 = por %p41, %p42
    %p44 = scmp.ne.s32.totalorder %s36, %s39
    %p45 = scmp.eq.s32.totalorder %s10, 0
    %p46 = por %p44, %p45
    %p47 = scmp.ne.s32.totalorder %s36, %s39
    %p48 = scmp.eq.s32.totalorder %s15, 1
    %p49 = por %p47, %p48
    %p50 = scmp.ne.s32.totalorder %s39, %s40
    %p51 = scmp.eq.s32.totalorder %s15, 0
    %p52 = por %p50, %p51
    %p53 = scmp.ne.s32.totalorder %s39, %s40
    %p54 = scmp.eq.s32.totalorder %s16, 1
    %p55 = por %p53, %p54
    %p57 = scmp.ne.s32.totalorder %s40, %s56
    %p58 = scmp.eq.s32.totalorder %s16, 0
    %p59 = por %p57, %p58
    %s61 = sadd.s32 %s60, 1
    %p64 = scmp.eq.s32.totalorder %s10, 1
    %p65 = scmp.ne.s32.totalorder %s60, %s62
    %p66 = scmp.eq.s32.totalorder %s10, 0
    %p67 = por %p65, %p66
    %p68 = scmp.ne.s32.totalorder %s60, %s62
    %p69 = scmp.eq.s32.totalorder %s15, 1
    %p70 = por %p68, %p69
    %p71 = scmp.ne.s32.totalorder %s62, %s63
    %p72 = scmp.eq.s32.totalorder %s15, 0
    %p73 = por %p71, %p72
    %p74 = scmp.ne.s32.totalorder %s62, %s63
    %p75 = scmp.eq.s32.totalorder %s16, 1
    %p76 = por %p74, %p75
    %p78 = scmp.ne.s32.totalorder %s63, %s77
    %p79 = scmp.eq.s32.totalorder %s16, 0
    %p80 = por %p78, %p79
    %s81 = smul.u32 %s17, %s18
    %s82 = smul.u32 %s29, %s25
    %s83 = ssub.s32 %s81, %s82
    %p84 = scmp.eq.s32.totalorder %s83, 0
    %s86 = sadd.s32 %s85, 1
    %s87 = scalar_select %p84, %s85, %s86
    %p90 = pneg %p84
    %p91 = scmp.eq.s32.totalorder %s10, 1
    %p92 = por %p90, %p91
    %p93 = scmp.ne.s32.totalorder %s85, %s88
    %p94 = scmp.eq.s32.totalorder %s10, 0
    %p95 = por %p93, %p94
    %p96 = scmp.ne.s32.totalorder %s85, %s88
    %p97 = scmp.eq.s32.totalorder %s15, 1
    %p98 = por %p96, %p97
    %p99 = scmp.ne.s32.totalorder %s88, %s89
    %p100 = scmp.eq.s32.totalorder %s15, 0
    %p101 = por %p99, %p100
    %p102 = scmp.ne.s32.totalorder %s88, %s89
    %p103 = scmp.eq.s32.totalorder %s16, 1
    %p104 = por %p102, %p103
    %p106 = scmp.ne.s32.totalorder %s89, %s105
    %p107 = scmp.eq.s32.totalorder %s16, 0
    %p108 = por %p106, %p107
    %s110 = sadd.s32 %s109, 1
    %p113 = scmp.eq.s32.totalorder %s10, 1
    %p114 = scmp.ne.s32.totalorder %s109, %s111
    %p115 = scmp.eq.s32.totalorder %s10, 0
    %p116 = por %p114, %p115
    %p117 = scmp.ne.s32.totalorder %s109, %s111
    %p118 = scmp.eq.s32.totalorder %s15, 1
    %p119 = por %p117, %p118
    %p120 = scmp.ne.s32.totalorder %s111, %s112
    %p121 = scmp.eq.s32.totalorder %s15, 0
    %p122 = por %p120, %p121
    %p123 = scmp.ne.s32.totalorder %s111, %s112
    %p124 = scmp.eq.s32.totalorder %s16, 1
    %p125 = por %p123, %p124
    %p127 = scmp.ne.s32.totalorder %s112, %s126
    %p128 = scmp.eq.s32.totalorder %s16, 0
    %p129 = por %p127, %p128
    %p130 = scmp.le.s32.totalorder 1, %s10
    %p131 = scmp.lt.s32.totalorder %s10, 3
    %p132 = pnand %p130, %p131
    %p133 = pneg %p132
    // Predicated region
    $region9: #{_sync_bn_forward.1} parent=5 // pred_check
      _
    $region10: #{_sync_bn_forward.1} parent=5 // pred_check_branch
      %135 = sbr.rel (%p132) target = $region12
    $region11: #{_sync_bn_forward.1} parent=5 // pred_region
      %s136 = ssub.s32 %s10, 1
      // Predicated region
      $region13: #{_sync_bn_forward.1} parent=11 // pred_check
        %p137 = pneg %p73
      $region14: #{_sync_bn_forward.1} parent=11 // pred_check_branch
        %139 = sbr.rel (%p137) target = $region16
      $region15: #{_sync_bn_forward.1} parent=11 // pred_region
        _
      $region16: #{_sync_bn_forward.1} parent=11 // pred_fallthru
        _
    $region12: #{_sync_bn_forward.1} parent=5 // pred_fallthru
      _
    %p140 = scmp.lt.s32.totalorder %s10, 2
    // Predicated region
    $region17: #{_sync_bn_forward.1} parent=5 // pred_check
      %p141 = pneg %p140
    $region18: #{_sync_bn_forward.1} parent=5 // pred_check_branch
      %143 = sbr.rel (%p141) target = $region20
    $region19: #{_sync_bn_forward.1} parent=5 // pred_region
      // Predicated region
      $region21: #{_sync_bn_forward.1} parent=19 // pred_check
        %p144 = pneg %p46
      $region22: #{_sync_bn_forward.1} parent=19 // pred_check_branch
        %146 = sbr.rel (%p144) target = $region24
      $region23: #{_sync_bn_forward.1} parent=19 // pred_region
        %s147 = ssub.s32 1, %s17
        %s148 = smul.u32 %s147, %s18
        %p149 = scmp.lt.s32.totalorder %s148, 0
        %s150 = scalar_select %p149, %s148, 0
        %s151 = smul.addr %s150, 8
        %s152 = scalar_lea.vmem %s0, %s151
        %s153 = ssub.s32 1, %s17
        %s154 = smul.u32 %s153, %s18
      $region24: #{_sync_bn_forward.1} parent=19 // pred_fallthru
        _
    $region20: #{_sync_bn_forward.1} parent=5 // pred_fallthru
      _
    %p155 = scmp.le.s32.totalorder 1, %s10
    %p156 = scmp.lt.s32.totalorder %s10, 3
    %p157 = pnand %p155, %p156
    %p158 = pneg %p157
    // Predicated region
    $region25: #{_sync_bn_forward.1} parent=5 // pred_check
      _
    $region26: #{_sync_bn_forward.1} parent=5 // pred_check_branch
      %160 = sbr.rel (%p157) target = $region28
    $region27: #{_sync_bn_forward.1} parent=5 // pred_region
      %s161 = ssub.s32 %s10, 1
      %s162 = ssub.s32 1, %s19
      %s163 = smul.u32 %s162, %s20
      %p164 = scmp.lt.s32.totalorder %s163, 0
      %s165 = scalar_select %p164, %s163, 0
      %s166 = smul.addr %s165, 8
      %s167 = scalar_lea.vmem %s0, %s166
      %p168 = pneg %p52
      %p169 = pneg %p49
      %p170 = pneg %p73
      %p171 = pneg %p70
      %p172 = pneg %p101
      %p173 = pneg %p98
      %s174 = smul.u32 %s19, %s20
      %p175 = scmp.lt.s32.totalorder %s174, 0
      %s176 = scalar_select %p175, %s174, 0
      %s177 = smul.addr %s176, 8
      %s178 = scalar_lea.vmem %s2, %s177
      %p179 = pneg %p122
      %p180 = pneg %p119
      %s181 = ssub.s32 1, %s19
      %s182 = smul.u32 %s181, %s20
      %p183 = scmp.lt.s32.totalorder %s182, 0
      %s184 = scalar_select %p183, %s182, 0
      %s185 = smul.addr %s184, 8
      %s186 = scalar_lea.vmem %s0, %s185
      %s187 = ssub.s32 1, %s19
      %s188 = smul.u32 %s187, %s20
      %s189 = smul.u32 %s19, %s20
      %p190 = scmp.lt.s32.totalorder %s189, 0
      %s191 = scalar_select %p190, %s189, 0
      %s192 = smul.addr %s191, 8
      %s193 = scalar_lea.vmem %s2, %s192
      %s194 = smul.u32 %s19, %s20
      %s195 = smul.u32 %s20, 8
      %p196 = scmp.eq.s32.totalorder %s19, 0
      // Predicated region
      $region29: #{_sync_bn_forward.1} parent=27 // pred_check
        %p197 = pneg %p196
      $region30: #{_sync_bn_forward.1} parent=27 // pred_check_branch
        %199 = sbr.rel (%p197) target = $region32
      $region31: #{_sync_bn_forward.1} parent=27 // pred_region
        %p200 = scmp.eq.s32.totalorder %s20, 0
        // Predicated region
        $region33: #{_sync_bn_forward.1} parent=31 // pred_check
          %p201 = pneg %p200
        $region34: #{_sync_bn_forward.1} parent=31 // pred_check_branch
          %203 = sbr.rel (%p201) target = $region36
        $region35: #{_sync_bn_forward.1} parent=31 // pred_region
          %204 = vst [vmem:[%s3] sm:$0xff] 0.0
        $region36: #{_sync_bn_forward.1} parent=31 // pred_fallthru
          _
        %v205 = vld [vmem:[%s186] sm:$0xff]
        %s206 = scalar_lea.vmem [#allocation2], %s195
        %207 = vst [vmem:[%s206] sm:$0xff] %v205
        %s208 = sadd.s32 %s195, 8
        %p209 = scmp.le.s32.totalorder %s208, 8
        // Predicated region
        $region37: #{_sync_bn_forward.1} parent=31 // pred_check
          %p210 = pneg %p209
        $region38: #{_sync_bn_forward.1} parent=31 // pred_check_branch
          %212 = sbr.rel (%p210) target = $region40
        $region39: #{_sync_bn_forward.1} parent=31 // pred_region
          %v213 = vld [vmem:[%s3] sm:$0x1]
          %v214 = vrot.slane %v205, 4
          %v215 = vadd.f32 %v205, %v214
          %v216 = vrot.slane %v215, 2
          %v217 = vadd.f32 %v215, %v216
          %v218 = vrot.slane %v217, 1
          %v219 = vadd.f32 %v217, %v218
          %v220 = vadd.f32 %v213, %v219
          %221 = vst [vmem:[%s3] sm:$0x1] %v220
          %v222 = vld [vmem:[%s3 + $0x1] sm:$0x1]
          %v223 = vmul.f32 %v205, %v205
          %v224 = vrot.slane %v223, 4
          %v225 = vadd.f32 %v223, %v224
          %v226 = vrot.slane %v225, 2
          %v227 = vadd.f32 %v225, %v226
          %v228 = vrot.slane %v227, 1
          %v229 = vadd.f32 %v227, %v228
          %v230 = vadd.f32 %v222, %v229
          %231 = vst [vmem:[%s3 + $0x1] sm:$0x1] %v230
        $region40: #{_sync_bn_forward.1} parent=31 // pred_fallthru
          _
        %p232 = scmp.lt.s32.totalorder %s195, 8
        %p233 = scmp.gt.s32.totalorder %s208, 8
        %p234 = pnand %p232, %p233
        %p235 = pneg %p234
        // Predicated region
        $region41: #{_sync_bn_forward.1} parent=31 // pred_check
          _
        $region42: #{_sync_bn_forward.1} parent=31 // pred_check_branch
          %237 = sbr.rel (%p234) target = $region44
        $region43: #{_sync_bn_forward.1} parent=31 // pred_region
          %v238 = vlaneseq
          %v239 = vshrl.u32 %v238, 7
          %v240 = vstv %s195
          %v241 = vadd.s32 %v240, %v239
          %vm242 = vcmp.lt.s32.totalorder %v241, 8
          %v243 = vsel %vm242, 1, 0
          %vm244 = vcmp.eq.s32.totalorder %v243, 1
          %v245 = vsel %vm244, %v205, 0.0
          %v246 = vld [vmem:[%s3] sm:$0x1]
          %v247 = vrot.slane %v245, 4
          %v248 = vadd.f32 %v245, %v247
          %v249 = vrot.slane %v248, 2
          %v250 = vadd.f32 %v248, %v249
          %v251 = vrot.slane %v250, 1
          %v252 = vadd.f32 %v250, %v251
          %v253 = vadd.f32 %v246, %v252
          %254 = vst [vmem:[%s3] sm:$0x1] %v253
          %v255 = vld [vmem:[%s3 + $0x1] sm:$0x1]
          %v256 = vmul.f32 %v245, %v245
          %v257 = vrot.slane %v256, 4
          %v258 = vadd.f32 %v256, %v257
          %v259 = vrot.slane %v258, 2
          %v260 = vadd.f32 %v258, %v259
          %v261 = vrot.slane %v260, 1
          %v262 = vadd.f32 %v260, %v261
          %v263 = vadd.f32 %v255, %v262
          %264 = vst [vmem:[%s3 + $0x1] sm:$0x1] %v263
        $region44: #{_sync_bn_forward.1} parent=31 // pred_fallthru
          _
      $region32: #{_sync_bn_forward.1} parent=27 // pred_fallthru
        _
      %p265 = scmp.eq.s32.totalorder %s19, 1
      // Predicated region
      $region45: #{_sync_bn_forward.1} parent=27 // pred_check
        %p266 = pneg %p265
      $region46: #{_sync_bn_forward.1} parent=27 // pred_check_branch
        %268 = sbr.rel (%p266) target = $region48
      $region47: #{_sync_bn_forward.1} parent=27 // pred_region
        %p269 = scmp.eq.s32.totalorder %s20, 0
        // Predicated region
        $region49: #{_sync_bn_forward.1} parent=47 // pred_check
          %p270 = pneg %p269
        $region50: #{_sync_bn_forward.1} parent=47 // pred_check_branch
          %272 = sbr.rel (%p270) target = $region52
        $region51: #{_sync_bn_forward.1} parent=47 // pred_region
          %v273 = vld [vmem:[%s3] sm:$0xff]
          %274 = vrot.lane.b32.xlu0 %v273, 16
          %v275 = vpop.permute.xlu0 %274
          %v276 = vadd.f32 %v273, %v275
          %277 = vrot.lane.b32.xlu0 %v276, 32
          %v278 = vpop.permute.xlu0 %277
          %v279 = vadd.f32 %v276, %v278
          %280 = vrot.lane.b32.xlu0 %v279, 64
          %v281 = vpop.permute.xlu0 %280
          %v282 = vadd.f32 %v279, %v281
          %v283 = vmul.f32 %v282, 0.015625
          %v284 = vmul.f32 %v283, %v283
          %v286 = vrot.slane %v284, 7
          %v288 = vsub.f32 %v283, %v286
          %v289 = vmax.f32 %v288, 0.0
          %v290 = vld [vmem:[%s1] sm:$0x1]
          %v291 = vadd.f32 %v289, 1e-05
          %v292 = vrsqrt.pop %v291
          %v294 = vrot.slane %v292, 1
          %v296 = vmul.f32 %v290, %v294
          %297 = vst [vmem:[%s3 + $0x2] sm:$0x1] %v296
          %v298 = vld [vmem:[%s1 + $0x1] sm:$0x1]
          %v299 = vmul.f32 %v283, %v296
          %v300 = vsub.f32 %v298, %v299
          %301 = vst [vmem:[%s3 + $0x3] sm:$0x1] %v300
        $region52: #{_sync_bn_forward.1} parent=47 // pred_fallthru
          _
        %s302 = scalar_lea.vmem [#allocation2], %s195
        %v303 = vld [vmem:[%s302] sm:$0xff]
        %v304 = vld [vmem:[%s3 + $0x2] sm:$0x1]
        %v305 = vlaneseq
        %v306 = vshrl.u32 %v305, 7
        %v307 = vsub.s32 0, %v306
        %v308 = vrot.slane %v304, %v307
        %v309 = vmul.f32 %v303, %v308
        %v310 = vld [vmem:[%s3 + $0x3] sm:$0x1]
        %v311 = vlaneseq
        %v312 = vshrl.u32 %v311, 7
        %v313 = vsub.s32 0, %v312
        %v314 = vrot.slane %v310, %v313
        %v315 = vadd.f32 %v309, %v314
        %316 = vst [vmem:[%s193] sm:$0xff] %v315
      $region48: #{_sync_bn_forward.1} parent=27 // pred_fallthru
        _
      %s317 = smul.u32 %s19, %s20
      %p318 = scmp.lt.s32.totalorder %s317, 0
      %s319 = scalar_select %p318, %s317, 0
      %s320 = smul.addr %s319, 8
      %s321 = scalar_lea.vmem %s2, %s320
      // Predicated region
      $region53: #{_sync_bn_forward.1} parent=27 // pred_check
        %p322 = pneg %p98
      $region54: #{_sync_bn_forward.1} parent=27 // pred_check_branch
        %324 = sbr.rel (%p322) target = $region56
      $region55: #{_sync_bn_forward.1} parent=27 // pred_region
        %s325 = smul.u32 %s19, %s20
      $region56: #{_sync_bn_forward.1} parent=27 // pred_fallthru
        _
      // Predicated region
      $region57: #{_sync_bn_forward.1} parent=27 // pred_check
        %p326 = pneg %p119
      $region58: #{_sync_bn_forward.1} parent=27 // pred_check_branch
        %328 = sbr.rel (%p326) target = $region60
      $region59: #{_sync_bn_forward.1} parent=27 // pred_region
        _
      $region60: #{_sync_bn_forward.1} parent=27 // pred_fallthru
        _
      // Predicated region
      $region61: #{_sync_bn_forward.1} parent=27 // pred_check
        %p329 = pneg %p119
      $region62: #{_sync_bn_forward.1} parent=27 // pred_check_branch
        %331 = sbr.rel (%p329) target = $region64
      $region63: #{_sync_bn_forward.1} parent=27 // pred_region
        _
      $region64: #{_sync_bn_forward.1} parent=27 // pred_fallthru
        _
    $region28: #{_sync_bn_forward.1} parent=5 // pred_fallthru
      _
    %p332 = scmp.le.s32.totalorder 2, %s10
    // Predicated region
    $region65: #{_sync_bn_forward.1} parent=5 // pred_check
      %p333 = pneg %p332
    $region66: #{_sync_bn_forward.1} parent=5 // pred_check_branch
      %335 = sbr.rel (%p333) target = $region68
    $region67: #{_sync_bn_forward.1} parent=5 // pred_region
      %s336 = ssub.s32 %s10, 2
      // Predicated region
      $region69: #{_sync_bn_forward.1} parent=67 // pred_check
        %p337 = pneg %p104
      $region70: #{_sync_bn_forward.1} parent=67 // pred_check_branch
        %339 = sbr.rel (%p337) target = $region72
      $region71: #{_sync_bn_forward.1} parent=67 // pred_region
        %s340 = smul.u32 %s21, %s22
        %p341 = scmp.lt.s32.totalorder %s340, 0
        %s342 = scalar_select %p341, %s340, 0
        %s343 = smul.addr %s342, 8
        %s344 = scalar_lea.vmem %s2, %s343
      $region72: #{_sync_bn_forward.1} parent=67 // pred_fallthru
        _
    $region68: #{_sync_bn_forward.1} parent=5 // pred_fallthru
      _
  $region6: #{_sync_bn_forward.1} parent=0 // loop_footer
    %s14 = sadd.s32 1, %s10
  $region7: #{_sync_bn_forward.1} parent=0 // loop_footer_branch
    %9 = sbr.rel target = $region3
  $region8: #{_sync_bn_forward.1} parent=0 // loop_exit
    _

</llo_original>
